<compile_context>
chip_gen: v7x
topology: tpu7x:2x2x1
jax: 0.10.0
libtpu: 0.0.40
codegen_flags: <defaults>
</compile_context>

<pallas_src>
import functools

import jax
import jax.numpy as jnp
from jax import lax
from jax.experimental import pallas as pl
from jax.experimental.pallas import tpu as pltpu


def _round_up(x, m):
    return (x + m - 1) // m * m


def _loss_kernel(w_ref, label_ref, centers_ref, emb_ref, logit_ref, out_ref,
                 *, n_classes, n_batch, tile_b, padded_batch,
                 epsilon, lamda, mxu_dtype):
    pid = pl.program_id(0)

    w = w_ref[0]                              # scalar f32 (SMEM)
    centers = centers_ref[...]                # (C_pad, D_pad) f32
    emb = emb_ref[...]                        # (TB, D_pad) f32
    logit = logit_ref[...]                    # (TB, C_pad) f32
    label = label_ref[...]                    # (TB, 1) int32

    tb, c_pad = logit.shape
    pad_classes = (c_pad != n_classes)
    neg_big = jnp.float32(-1e30)

    class_iota = lax.broadcasted_iota(jnp.int32, (tb, c_pad), 1)
    hit = class_iota == label                 # (TB, C_pad) bool one-hot of label

    # ---- centers[label] via one-hot matmul on the MXU (bf16 operands, f32 acc) ----
    # TODO(synk): for very large n_classes, swap this for a scalar-prefetch DMA row
    # gather (PrefetchScalarGridSpec + pl.Element index_map) instead of a B*C*D matmul.
    centers_batch = jnp.dot(hit.astype(mxu_dtype), centers.astype(mxu_dtype),
                            preferred_element_type=jnp.float32)      # (TB, D_pad) f32

    # ---- pseudo-label rows: softmax_j cos(centers[label_b], centers[j]) ----------
    # normalize with rsqrt (EUP) instead of dividing the similarity matrix (VALU);
    # eps clamp keeps zero-norm (e.g. padded) center rows finite.
    c_sq = jnp.sum(centers * centers, axis=1, keepdims=True)          # (C_pad, 1)
    centers_n = (centers * lax.rsqrt(jnp.maximum(c_sq, 1e-12))).astype(mxu_dtype)
    cb_sq = jnp.sum(centers_batch * centers_batch, axis=1, keepdims=True)
    cb_n = (centers_batch * lax.rsqrt(jnp.maximum(cb_sq, 1e-12))).astype(mxu_dtype)

    cos = lax.dot_general(cb_n, centers_n,
                          dimension_numbers=(((1,), (1,)), ((), ())),
                          preferred_element_type=jnp.float32)         # (TB, C_pad)

    if pad_classes:
        class_valid = class_iota < n_classes
        cos = jnp.where(class_valid, cos, neg_big)
        logit = jnp.where(class_valid, logit, neg_big)

    cmax = jnp.max(cos, axis=1, keepdims=True)
    cexp = jnp.exp(cos - cmax)
    pseudo = cexp * pl.reciprocal(jnp.sum(cexp, axis=1, keepdims=True), approx=True)

    smoothed = jnp.where(hit, 1.0 - epsilon, epsilon / (n_classes - 1))
    if pad_classes:
        smoothed = jnp.where(class_valid, smoothed, 0.0)
    fused = (1.0 - w) * smoothed + w * pseudo                          # (TB, C_pad)

    # ---- cross entropy with log_softmax(logit, dim=1) ----------------------------
    lmax = jnp.max(logit, axis=1, keepdims=True)
    shifted = logit - lmax
    lse = jnp.log(jnp.sum(jnp.exp(shifted), axis=1, keepdims=True))
    log_logit = shifted - lse
    ce_rows = -jnp.sum(log_logit * fused, axis=1, keepdims=True)       # (TB, 1)

    # ---- center loss: ||emb - centers[label]||^2 ---------------------------------
    diff = emb - centers_batch
    sq_rows = jnp.sum(diff * diff, axis=1, keepdims=True)              # (TB, 1)

    if padded_batch:
        row_valid = (lax.broadcasted_iota(jnp.int32, (tb, 1), 0)
                     + pid * tile_b) < n_batch
        ce_rows = jnp.where(row_valid, ce_rows, 0.0)
        sq_rows = jnp.where(row_valid, sq_rows, 0.0)

    partial = (jnp.sum(ce_rows, axis=0, keepdims=True) * (1.0 / n_batch)
               + jnp.sum(sq_rows, axis=0, keepdims=True) * (lamda / (2.0 * n_batch)))

    # Output block index is constant across the (reduction) grid axis, so out_ref
    # stays VMEM-resident and acts as the accumulator; it is written back to HBM
    # once after the last step. The single-f32 VMEM tile is accepted knowingly.
    @pl.when(pid == 0)
    def _():
        out_ref[...] = jnp.zeros_like(out_ref)

    out_ref[...] += partial


def pseudo_label_ce_loss(embedding, logit, label, w, centers,
                         epsilon=0.2, lamda=0.003, batch_tile=128,
                         mxu_dtype=jnp.bfloat16):
    """Pallas TPU implementation of PseudoLabelCrossEntropyLoss.forward (cosine)."""
    B, C = logit.shape
    C2, D = centers.shape
    assert C2 == C and embedding.shape == (B, D) and label.shape == (B,)
    if isinstance(w, (int, float)):
        assert 0.0 <= w < 1.0, "the factor has to be in [0, 1)"

    # Lane-dense padding (classes / features -> multiple of 128, batch tile -> 8).
    c_pad = _round_up(C, 128)
    d_pad = _round_up(D, 128)
    tb = min(_round_up(B, 8), _round_up(batch_tile, 8))
    b_pad = _round_up(B, tb)
    num_tiles = b_pad // tb

    emb_p = jnp.pad(embedding.astype(jnp.float32), ((0, b_pad - B), (0, d_pad - D)))
    logit_p = jnp.pad(logit.astype(jnp.float32), ((0, b_pad - B), (0, c_pad - C)))
    centers_p = jnp.pad(centers.astype(jnp.float32), ((0, c_pad - C), (0, d_pad - D)))
    label_p = jnp.pad(label.astype(jnp.int32), (0, b_pad - B)).reshape(b_pad, 1)
    w_arr = jnp.asarray(w, jnp.float32).reshape(1)

    kernel = functools.partial(
        _loss_kernel, n_classes=C, n_batch=B, tile_b=tb,
        padded_batch=(b_pad != B), epsilon=float(epsilon), lamda=float(lamda),
        mxu_dtype=mxu_dtype)

    out = pl.pallas_call(
        kernel,
        out_shape=jax.ShapeDtypeStruct((1, 1), jnp.float32),
        grid=(num_tiles,),
        in_specs=[
            pl.BlockSpec(memory_space=pltpu.MemorySpace.SMEM),         # w (scalar)
            pl.BlockSpec((tb, 1), lambda i: (i, 0)),                   # label tile
            pl.BlockSpec((c_pad, d_pad), lambda i: (0, 0)),            # centers (resident)
            pl.BlockSpec((tb, d_pad), lambda i: (i, 0)),               # embedding tile
            pl.BlockSpec((tb, c_pad), lambda i: (i, 0)),               # logit tile
        ],
        out_specs=pl.BlockSpec((1, 1), lambda i: (0, 0)),
        compiler_params=pltpu.CompilerParams(
            dimension_semantics=("arbitrary",)),                        # reduction axis
    )(w_arr, label_p, centers_p, emb_p, logit_p)
    return out[0, 0]


def _reference(embedding, logit, label, w, centers, epsilon=0.2, lamda=0.003):
    """Pure-JAX reference mirroring the PyTorch forward."""
    B, C = logit.shape
    smoothed = jnp.full((B, C), epsilon / (C - 1), jnp.float32)
    smoothed = smoothed.at[jnp.arange(B), label].set(1.0 - epsilon)
    gram = centers @ centers.T
    norm = jnp.linalg.norm(centers, axis=1, keepdims=True)
    pseudo_mat = jax.nn.softmax(gram / (norm * norm.T), axis=1)
    pseudo = pseudo_mat[label]
    fused = (1.0 - w) * smoothed + w * pseudo
    log_logit = jax.nn.log_softmax(logit, axis=1)
    ce = -jnp.sum(log_logit * fused) / B
    closs = jnp.sum((embedding - centers[label]) ** 2) / 2.0 / B
    return ce + closs * lamda


if __name__ == "__main__":
    n_classes, feature_dim, batch = 16, 32, 8
    epsilon, lamda = 0.2, 0.003
    w = 0.3

    key = jax.random.PRNGKey(0)
    k1, k2, k3, k4 = jax.random.split(key, 4)
    # deterministic "randn" init for the centers parameter (torch.randn equivalent)
    centers = jax.random.normal(k1, (n_classes, feature_dim), jnp.float32)
    embedding = jax.random.normal(k2, (batch, feature_dim), jnp.float32)
    logit = jax.random.normal(k3, (batch, n_classes), jnp.float32)
    label = jax.random.randint(k4, (batch,), 0, n_classes, jnp.int32)

    loss = pseudo_label_ce_loss(embedding, logit, label, w, centers,
                                epsilon=epsilon, lamda=lamda)
    loss = jax.block_until_ready(loss)

    ref = _reference(embedding, logit, label, w, centers, epsilon=epsilon, lamda=lamda)
    # bf16 MXU operands + approximate EUP reciprocal in the softmax introduce
    # ~1e-3-level rounding; tolerance is loosened accordingly (f32 accumulation kept).
    tol = 1e-2 * max(1.0, abs(float(ref)))
    assert abs(float(loss) - float(ref)) < tol, (loss, ref)

    print("KERNEL_OK")
</pallas_src>

<mosaic_0001>
module attributes {stable_mosaic.version = 11 : i64} {
  func.func @_loss_kernel(%arg0: i32, %arg1: memref<1xf32, #tpu.memory_space<smem>>, %arg2: memref<8x1xi32, #tpu.memory_space<vmem>>, %arg3: memref<128x128xf32, #tpu.memory_space<vmem>>, %arg4: memref<8x128xf32, #tpu.memory_space<vmem>>, %arg5: memref<8x128xf32, #tpu.memory_space<vmem>>, %arg6: memref<1x1xf32, #tpu.memory_space<vmem>>) attributes {dimension_semantics = [#tpu.dimension_semantics<arbitrary>], iteration_bounds = array<i64: 1>, scalar_prefetch = 0 : i64, scratch_operands = 0 : i64, tpu.core_type = #tpu.core_type<tc>, window_params = [{transform_indices = @transform_0, window_bounds = array<i64: 1>}, {transform_indices = @transform_1, window_bounds = array<i64: 8, 1>}, {pipeline_mode = #tpu.pipeline_mode<synchronous>, transform_indices = @transform_2, window_bounds = array<i64: 128, 128>}, {transform_indices = @transform_3, window_bounds = array<i64: 8, 128>}, {transform_indices = @transform_4, window_bounds = array<i64: 8, 128>}, {pipeline_mode = #tpu.pipeline_mode<synchronous>, transform_indices = @transform_5, window_bounds = array<i64: 1, 1>}]} {
    %c0 = arith.constant 0 : index
    %0 = memref.load %arg1[%c0] : memref<1xf32, #tpu.memory_space<smem>>
    %c0_0 = arith.constant 0 : index
    %c0_1 = arith.constant 0 : index
    %1 = vector.load %arg3[%c0_0, %c0_1] : memref<128x128xf32, #tpu.memory_space<vmem>>, vector<128x128xf32>
    %c0_2 = arith.constant 0 : index
    %c0_3 = arith.constant 0 : index
    %2 = vector.load %arg4[%c0_2, %c0_3] : memref<8x128xf32, #tpu.memory_space<vmem>>, vector<8x128xf32>
    %c0_4 = arith.constant 0 : index
    %c0_5 = arith.constant 0 : index
    %3 = vector.load %arg5[%c0_4, %c0_5] : memref<8x128xf32, #tpu.memory_space<vmem>>, vector<8x128xf32>
    %c0_6 = arith.constant 0 : index
    %c0_7 = arith.constant 0 : index
    %4 = vector.load %arg2[%c0_6, %c0_7] : memref<8x1xi32, #tpu.memory_space<vmem>>, vector<8x1xi32>
    %5 = tpu.iota {dimensions = array<i32: 1>} : vector<8x128xi32>
    %6 = vector.broadcast %4 : vector<8x1xi32> to vector<8x128xi32>
    %7 = arith.cmpi eq, %5, %6 : vector<8x128xi32>
    %8 = arith.extui %7 : vector<8x128xi1> to vector<8x128xi32>
    %9 = arith.sitofp %8 : vector<8x128xi32> to vector<8x128xf32>
    %10 = arith.truncf %9 : vector<8x128xf32> to vector<8x128xbf16>
    %11 = arith.truncf %1 : vector<128x128xf32> to vector<128x128xbf16>
    %cst = arith.constant dense<0.000000e+00> : vector<8x128xf32>
    %12 = tpu.matmul %10, %11, %cst {dimension_numbers = #tpu.dot_dimension_numbers<[1], [0], [0], [1], [0, 0, 1, 1], [], []>} : vector<8x128xbf16>, vector<128x128xbf16>, vector<8x128xf32> -> vector<8x128xf32>
    %13 = arith.mulf %1, %1 : vector<128x128xf32>
    %cst_8 = arith.constant dense<0.000000e+00> : vector<128xf32>
    %14 = vector.multi_reduction <add>, %13, %cst_8 [1] : vector<128x128xf32> to vector<128xf32>
    %15 = vector.shape_cast %14 : vector<128xf32> to vector<128x1xf32>
    %cst_9 = arith.constant 9.99999996E-13 : f32
    %16 = vector.broadcast %cst_9 : f32 to vector<128x1xf32>
    %17 = arith.maximumf %15, %16 : vector<128x1xf32>
    %18 = math.rsqrt %17 : vector<128x1xf32>
    %19 = vector.broadcast %18 : vector<128x1xf32> to vector<128x128xf32>
    %20 = arith.mulf %1, %19 : vector<128x128xf32>
    %21 = arith.truncf %20 : vector<128x128xf32> to vector<128x128xbf16>
    %22 = arith.mulf %12, %12 : vector<8x128xf32>
    %cst_10 = arith.constant dense<0.000000e+00> : vector<8xf32>
    %23 = vector.multi_reduction <add>, %22, %cst_10 [1] : vector<8x128xf32> to vector<8xf32>
    %24 = vector.shape_cast %23 : vector<8xf32> to vector<8x1xf32>
    %cst_11 = arith.constant 9.99999996E-13 : f32
    %25 = vector.broadcast %cst_11 : f32 to vector<8x1xf32>
    %26 = arith.maximumf %24, %25 : vector<8x1xf32>
    %27 = math.rsqrt %26 : vector<8x1xf32>
    %28 = vector.broadcast %27 : vector<8x1xf32> to vector<8x128xf32>
    %29 = arith.mulf %12, %28 : vector<8x128xf32>
    %30 = arith.truncf %29 : vector<8x128xf32> to vector<8x128xbf16>
    %cst_12 = arith.constant dense<0.000000e+00> : vector<8x128xf32>
    %31 = tpu.matmul %30, %21, %cst_12 {dimension_numbers = #tpu.dot_dimension_numbers<[1], [1], [0], [0], [0, 0, 1, 0], [], []>} : vector<8x128xbf16>, vector<128x128xbf16>, vector<8x128xf32> -> vector<8x128xf32>
    %c16_i32 = arith.constant 16 : i32
    %32 = vector.broadcast %c16_i32 : i32 to vector<8x128xi32>
    %33 = arith.cmpi slt, %5, %32 : vector<8x128xi32>
    %cst_13 = arith.constant -1.000000e+30 : f32
    %34 = vector.broadcast %cst_13 : f32 to vector<8x128xf32>
    %35 = arith.select %33, %31, %34 : vector<8x128xi1>, vector<8x128xf32>
    %cst_14 = arith.constant -1.000000e+30 : f32
    %36 = vector.broadcast %cst_14 : f32 to vector<8x128xf32>
    %37 = arith.select %33, %3, %36 : vector<8x128xi1>, vector<8x128xf32>
    %cst_15 = arith.constant dense<0xFF800000> : vector<8xf32>
    %38 = vector.multi_reduction <maximumf>, %35, %cst_15 [1] : vector<8x128xf32> to vector<8xf32>
    %39 = vector.shape_cast %38 : vector<8xf32> to vector<8x1xf32>
    %40 = vector.broadcast %39 : vector<8x1xf32> to vector<8x128xf32>
    %41 = arith.subf %35, %40 : vector<8x128xf32>
    %42 = math.exp %41 : vector<8x128xf32>
    %cst_16 = arith.constant dense<0.000000e+00> : vector<8xf32>
    %43 = vector.multi_reduction <add>, %42, %cst_16 [1] : vector<8x128xf32> to vector<8xf32>
    %44 = vector.shape_cast %43 : vector<8xf32> to vector<8x1xf32>
    %45 = tpu.reciprocal %44 {approx = true} : vector<8x1xf32> -> vector<8x1xf32>
    %46 = vector.broadcast %45 : vector<8x1xf32> to vector<8x128xf32>
    %47 = arith.mulf %42, %46 : vector<8x128xf32>
    %cst_17 = arith.constant 8.000000e-01 : f32
    %cst_18 = arith.constant 0.0133333337 : f32
    %48 = vector.broadcast %cst_17 : f32 to vector<8x128xf32>
    %49 = vector.broadcast %cst_18 : f32 to vector<8x128xf32>
    %50 = arith.select %7, %48, %49 : vector<8x128xi1>, vector<8x128xf32>
    %cst_19 = arith.constant 0.000000e+00 : f32
    %51 = vector.broadcast %cst_19 : f32 to vector<8x128xf32>
    %52 = arith.select %33, %50, %51 : vector<8x128xi1>, vector<8x128xf32>
    %cst_20 = arith.constant 1.000000e+00 : f32
    %53 = arith.subf %cst_20, %0 : f32
    %54 = vector.broadcast %53 : f32 to vector<8x128xf32>
    %55 = arith.mulf %54, %52 : vector<8x128xf32>
    %56 = vector.broadcast %0 : f32 to vector<8x128xf32>
    %57 = arith.mulf %56, %47 : vector<8x128xf32>
    %58 = arith.addf %55, %57 : vector<8x128xf32>
    %cst_21 = arith.constant dense<0xFF800000> : vector<8xf32>
    %59 = vector.multi_reduction <maximumf>, %37, %cst_21 [1] : vector<8x128xf32> to vector<8xf32>
    %60 = vector.shape_cast %59 : vector<8xf32> to vector<8x1xf32>
    %61 = vector.broadcast %60 : vector<8x1xf32> to vector<8x128xf32>
    %62 = arith.subf %37, %61 : vector<8x128xf32>
    %63 = math.exp %62 : vector<8x128xf32>
    %cst_22 = arith.constant dense<0.000000e+00> : vector<8xf32>
    %64 = vector.multi_reduction <add>, %63, %cst_22 [1] : vector<8x128xf32> to vector<8xf32>
    %65 = vector.shape_cast %64 : vector<8xf32> to vector<8x1xf32>
    %66 = math.log %65 : vector<8x1xf32>
    %67 = vector.broadcast %66 : vector<8x1xf32> to vector<8x128xf32>
    %68 = arith.subf %62, %67 : vector<8x128xf32>
    %69 = arith.mulf %68, %58 : vector<8x128xf32>
    %cst_23 = arith.constant dense<0.000000e+00> : vector<8xf32>
    %70 = vector.multi_reduction <add>, %69, %cst_23 [1] : vector<8x128xf32> to vector<8xf32>
    %71 = vector.shape_cast %70 : vector<8xf32> to vector<8x1xf32>
    %cst_24 = arith.constant 0.000000e+00 : f32
    %72 = vector.broadcast %cst_24 : f32 to vector<8x1xf32>
    %73 = arith.subf %72, %71 : vector<8x1xf32>
    %74 = arith.subf %2, %12 : vector<8x128xf32>
    %75 = arith.mulf %74, %74 : vector<8x128xf32>
    %cst_25 = arith.constant dense<0.000000e+00> : vector<8xf32>
    %76 = vector.multi_reduction <add>, %75, %cst_25 [1] : vector<8x128xf32> to vector<8xf32>
    %77 = vector.shape_cast %76 : vector<8xf32> to vector<8x1xf32>
    %cst_26 = arith.constant dense<0.000000e+00> : vector<1xf32>
    %78 = vector.multi_reduction <add>, %73, %cst_26 [0] : vector<8x1xf32> to vector<1xf32>
    %79 = vector.shape_cast %78 : vector<1xf32> to vector<1x1xf32>
    %cst_27 = arith.constant 1.250000e-01 : f32
    %80 = vector.broadcast %cst_27 : f32 to vector<1x1xf32>
    %81 = arith.mulf %79, %80 : vector<1x1xf32>
    %cst_28 = arith.constant dense<0.000000e+00> : vector<1xf32>
    %82 = vector.multi_reduction <add>, %77, %cst_28 [0] : vector<8x1xf32> to vector<1xf32>
    %83 = vector.shape_cast %82 : vector<1xf32> to vector<1x1xf32>
    %cst_29 = arith.constant 1.875000e-04 : f32
    %84 = vector.broadcast %cst_29 : f32 to vector<1x1xf32>
    %85 = arith.mulf %83, %84 : vector<1x1xf32>
    %86 = arith.addf %81, %85 : vector<1x1xf32>
    %c0_i32 = arith.constant 0 : i32
    %87 = arith.cmpi eq, %arg0, %c0_i32 : i32
    %88 = arith.extui %87 : i1 to i32
    %c0_i32_30 = arith.constant 0 : i32
    %89 = arith.cmpi ne, %88, %c0_i32_30 : i32
    scf.if %89 {
      %cst_35 = arith.constant 0.000000e+00 : f32
      %93 = vector.broadcast %cst_35 : f32 to vector<1x1xf32>
      %c0_36 = arith.constant 0 : index
      %c0_37 = arith.constant 0 : index
      %94 = vector.load %arg6[%c0_36, %c0_37] : memref<1x1xf32, #tpu.memory_space<vmem>>, vector<1x1xf32>
      tpu.vector_store %arg6[%c0_36, %c0_37], %93 {strides = array<i32>} : memref<1x1xf32, #tpu.memory_space<vmem>>, vector<1x1xf32>,
    } else {
    }
    %c0_31 = arith.constant 0 : index
    %c0_32 = arith.constant 0 : index
    %90 = vector.load %arg6[%c0_31, %c0_32] : memref<1x1xf32, #tpu.memory_space<vmem>>, vector<1x1xf32>
    %91 = arith.addf %90, %86 : vector<1x1xf32>
    %c0_33 = arith.constant 0 : index
    %c0_34 = arith.constant 0 : index
    %92 = vector.load %arg6[%c0_33, %c0_34] : memref<1x1xf32, #tpu.memory_space<vmem>>, vector<1x1xf32>
    tpu.vector_store %arg6[%c0_33, %c0_34], %91 {strides = array<i32>} : memref<1x1xf32, #tpu.memory_space<vmem>>, vector<1x1xf32>,
    return
  }
  func.func @transform_0(%arg0: i32) -> i32 {
    %c0_i32 = arith.constant 0 : i32
    %c0_i32_0 = arith.constant 0 : i32
    return %c0_i32 : i32
  }
  func.func @transform_1(%arg0: i32) -> (i32, i32) {
    %c0_i32 = arith.constant 0 : i32
    %c0_i32_0 = arith.constant 0 : i32
    return %arg0, %c0_i32 : i32, i32
  }
  func.func @transform_2(%arg0: i32) -> (i32, i32) {
    %c0_i32 = arith.constant 0 : i32
    %c0_i32_0 = arith.constant 0 : i32
    %c0_i32_1 = arith.constant 0 : i32
    return %c0_i32, %c0_i32_0 : i32, i32
  }
  func.func @transform_3(%arg0: i32) -> (i32, i32) {
    %c0_i32 = arith.constant 0 : i32
    %c0_i32_0 = arith.constant 0 : i32
    return %arg0, %c0_i32 : i32, i32
  }
  func.func @transform_4(%arg0: i32) -> (i32, i32) {
    %c0_i32 = arith.constant 0 : i32
    %c0_i32_0 = arith.constant 0 : i32
    return %arg0, %c0_i32 : i32, i32
  }
  func.func @transform_5(%arg0: i32) -> (i32, i32) {
    %c0_i32 = arith.constant 0 : i32
    %c0_i32_0 = arith.constant 0 : i32
    %c0_i32_1 = arith.constant 0 : i32
    return %c0_i32, %c0_i32_0 : i32, i32
  }
}

</mosaic_0001>

<llo_original>
// kernel: tpu_custom_call.1
$region0: #{tpu_custom_call.1}
  #allocation0 [shape = 'u32[]', space=smem, size = 0x4, offset = 0x4, fixed_abs, tag = 'smem constant byte address 0x4 - core index']
  #allocation1 [shape = 'u32[144,128]{1,0:T(1,128)}', space=vmem, size = 0x12000, scoped, tag = 'internal scratch']
  #allocation2 [shape = 'f32[1]{0:T(128)S(6)}', space=smem, size = 0x200, scoped, tag = 'scoped memory for tpu_custom_call.1']
  %s0 = inlined_call_operand.<no memory space> [shape: f32[1], index: 0, kind: input, shape index: {}]
  %s1 = inlined_call_operand.vmem [shape: s32[8,1], index: 1, kind: input, shape index: {}]
  %s2 = inlined_call_operand.hbm [shape: f32[128,128], index: 2, kind: input, shape index: {}]
  %s3 = inlined_call_operand.vmem [shape: f32[8,128], index: 3, kind: input, shape index: {}]
  %s4 = inlined_call_operand.vmem [shape: f32[8,128], index: 4, kind: input, shape index: {}]
  %s5 = inlined_call_operand.hbm [shape: f32[1,1], index: 5, kind: output, shape index: {}]
  %s6 = sld [smem:[#allocation0]]
  $region38: #{tpu_custom_call.1} parent=0
    _
  %s8 = ssub.s32 1, %s6
  %s9 = scalar_select 0, %s8, %s6
  %10 = sst [smem:[#allocation2]] %s0
  $region1: #{tpu_custom_call.1} parent=0
    #allocation3 [shape = 'u8[65536]{0}', space=vmem, size = 0x10000, scoped, tag = 'input window, operand 2, single buffered']
    #allocation4 [shape = 's32[1]{0}', space=sflag, size = 0x4, scoped, tag = 'scoped memory for tpu_custom_call.1']
    #allocation5 [shape = 's32[1]{0}', space=sflag, size = 0x4, scoped, tag = 'scoped memory for tpu_custom_call.1']
    #allocation6 [shape = 'u8[512]{0}', space=vmem, size = 0x400, scoped, tag = 'output window, operand 0, single buffered']
    %11 = vsyncpa [#allocation4], 0
    %12 = vsyncpa [#allocation5], 0
    // Predicated region
    $region2: #{tpu_custom_call.1} parent=1 // pred_check
      _
    $region3: #{tpu_custom_call.1} parent=1 // pred_check_branch
      %14 = sbr.rel (0) target = $region5
    $region4: #{tpu_custom_call.1} parent=1 // pred_region
      _
    $region5: #{tpu_custom_call.1} parent=1 // pred_fallthru
      _
    // Predicated region
    $region6: #{tpu_custom_call.1} parent=1 // pred_check
      _
    $region7: #{tpu_custom_call.1} parent=1 // pred_check_branch
      %16 = sbr.rel (0) target = $region9
    $region8: #{tpu_custom_call.1} parent=1 // pred_region
      _
    $region9: #{tpu_custom_call.1} parent=1 // pred_fallthru
      _
    // Predicated region
    $region10: #{tpu_custom_call.1} parent=1 // pred_check
      _
    $region11: #{tpu_custom_call.1} parent=1 // pred_check_branch
      %18 = sbr.rel (0) target = $region13
    $region12: #{tpu_custom_call.1} parent=1 // pred_region
      %s20 = ssub.s32 2048, 2048
      %21 = vsyncadd [#allocation4], %s20
      %s22 = sshll.u32 [#allocation3], 4
      %s23 = int_to_ptr.vmem [resolvable:$true] %s22
      %28 = dma.hbm_to_vmem [thread:$0]  %s2, 2048, %s23, [#allocation4], 128, 128, 8
    $region13: #{tpu_custom_call.1} parent=1 // pred_fallthru
      _
    // Predicated region
    $region14: #{tpu_custom_call.1} parent=1 // pred_check
      _
    $region15: #{tpu_custom_call.1} parent=1 // pred_check_branch
      %30 = sbr.rel (0) target = $region17
    $region16: #{tpu_custom_call.1} parent=1 // pred_region
      _
    $region17: #{tpu_custom_call.1} parent=1 // pred_fallthru
      _
    // Predicated region
    $region18: #{tpu_custom_call.1} parent=1 // pred_check
      _
    $region19: #{tpu_custom_call.1} parent=1 // pred_check_branch
      %32 = sbr.rel (0) target = $region21
    $region20: #{tpu_custom_call.1} parent=1 // pred_region
      _
    $region21: #{tpu_custom_call.1} parent=1 // pred_fallthru
      _
    // Predicated region
    $region22: #{tpu_custom_call.1} parent=1 // pred_check
      _
    $region23: #{tpu_custom_call.1} parent=1 // pred_check_branch
      %34 = sbr.rel (0) target = $region25
    $region24: #{tpu_custom_call.1} parent=1 // pred_region
      %35 = dma.done [#allocation4], 2048
    $region25: #{tpu_custom_call.1} parent=1 // pred_fallthru
      _
    %s37 = sld [smem:[#allocation2]]
    %v38 = vld [vmem:[#allocation3] sm:$0xff]
    %v39 = vld [vmem:[#allocation3 + $0x8] sm:$0xff]
    %v40 = vld [vmem:[#allocation3 + $0x10] sm:$0xff]
    %v41 = vld [vmem:[#allocation3 + $0x18] sm:$0xff]
    %v42 = vld [vmem:[#allocation3 + $0x20] sm:$0xff]
    %v43 = vld [vmem:[#allocation3 + $0x28] sm:$0xff]
    %v44 = vld [vmem:[#allocation3 + $0x30] sm:$0xff]
    %v45 = vld [vmem:[#allocation3 + $0x38] sm:$0xff]
    %v46 = vld [vmem:[#allocation3 + $0x40] sm:$0xff]
    %v47 = vld [vmem:[#allocation3 + $0x48] sm:$0xff]
    %v48 = vld [vmem:[#allocation3 + $0x50] sm:$0xff]
    %v49 = vld [vmem:[#allocation3 + $0x58] sm:$0xff]
    %v50 = vld [vmem:[#allocation3 + $0x60] sm:$0xff]
    %v51 = vld [vmem:[#allocation3 + $0x68] sm:$0xff]
    %v52 = vld [vmem:[#allocation3 + $0x70] sm:$0xff]
    %v53 = vld [vmem:[#allocation3 + $0x78] sm:$0xff]
    %v54 = vld [vmem:[%s3] sm:$0xff]
    %v55 = vld [vmem:[%s4] sm:$0xff]
    %v56 = vld [vmem:[%s1] sm:$0xff]
    %v57 = vlaneseq
    %v58 = vand.u32 %v57, 127
    %59 = vset.pattern.permute.xlu0 0
    %60 = vperm.xlu0 %59, %v56
    %v61 = vpop.permute.xlu0 %60
    %vm62 = vcmp.eq.s32.totalorder %v58, %v61
    %v63 = vsel %vm62, 1, 0
    %v64 = vcvt.s32.f32 %v63
    %v65 = vpack.c.bf16 %v64, %v64
    %v66 = vpack.c.bf16 %v39, %v38
    %v67 = vpack.c.bf16 %v41, %v40
    %v68 = vpack.c.bf16 %v43, %v42
    %v69 = vpack.c.bf16 %v45, %v44
    %v70 = vpack.c.bf16 %v47, %v46
    %v71 = vpack.c.bf16 %v49, %v48
    %v72 = vpack.c.bf16 %v51, %v50
    %v73 = vpack.c.bf16 %v53, %v52
    %74 = vmatprep.subr.bf16.mxu0 0
    %75 = vmatpush1.bf16.msra.mxu0 %v66
    %76 = vmatprep.subr.bf16.mxu0 0
    %77 = vmatpush1.bf16.msra.mxu0 %v67
    %78 = vmatprep.subr.bf16.mxu0 0
    %79 = vmatpush1.bf16.msra.mxu0 %v68
    %80 = vmatprep.subr.bf16.mxu0 0
    %81 = vmatpush1.bf16.msra.mxu0 %v69
    %82 = vmatprep.subr.bf16.mxu0 0
    %83 = vmatpush1.bf16.msra.mxu0 %v70
    %84 = vmatprep.subr.bf16.mxu0 0
    %85 = vmatpush1.bf16.msra.mxu0 %v71
    %86 = vmatprep.subr.bf16.mxu0 0
    %87 = vmatpush1.bf16.msra.mxu0 %v72
    %88 = vmatprep.subr.bf16.mxu0 0
    %89 = vmatpush1.bf16.msra.mxu0 %v73
    %90 = vmatprep.subr.bf16.mxu0 0
    %91 = vmatpush1.bf16.msra.mxu0 0
    %92 = vmatprep.subr.bf16.mxu0 0
    %93 = vmatpush1.bf16.msra.mxu0 0
    %94 = vmatprep.subr.bf16.mxu0 0
    %95 = vmatpush1.bf16.msra.mxu0 0
    %96 = vmatprep.subr.bf16.mxu0 0
    %97 = vmatpush1.bf16.msra.mxu0 0
    %98 = vmatprep.subr.bf16.mxu0 0
    %99 = vmatpush1.bf16.msra.mxu0 0
    %100 = vmatprep.subr.bf16.mxu0 0
    %101 = vmatpush1.bf16.msra.mxu0 0
    %102 = vmatprep.subr.bf16.mxu0 0
    %103 = vmatpush1.bf16.msra.mxu0 0
    %104 = vmatprep.subr.bf16.mxu0 0
    %105 = vmatpush1.bf16.msra.mxu0 0
    %106 = vmatprep.mubr.bf16.mxu0 0
    %107 = vmatmul.mubr.bf16.gmra.mrb[0].mxu0 %v65
    %v108 = vpop.f32.mrb[0].mxu0
    %v109 = vadd.f32 0.0, %v108
    %v110 = vpop.f32.mrb[0].mxu0
    %v111 = vpop.f32.mrb[0].mxu0
    %v112 = vpop.f32.mrb[0].mxu0
    %113 = vdwg.mxu0
    %v114 = vmul.f32 %v38, %v38
    %v115 = vmul.f32 %v39, %v39
    %v116 = vmul.f32 %v40, %v40
    %v117 = vmul.f32 %v41, %v41
    %v118 = vmul.f32 %v42, %v42
    %v119 = vmul.f32 %v43, %v43
    %v120 = vmul.f32 %v44, %v44
    %v121 = vmul.f32 %v45, %v45
    %v122 = vmul.f32 %v46, %v46
    %v123 = vmul.f32 %v47, %v47
    %v124 = vmul.f32 %v48, %v48
    %v125 = vmul.f32 %v49, %v49
    %v126 = vmul.f32 %v50, %v50
    %v127 = vmul.f32 %v51, %v51
    %v128 = vmul.f32 %v52, %v52
    %v129 = vmul.f32 %v53, %v53
    %130 = vadd.xlane.f32.xlu0 %v114
    %v131 = vpop.xlane.xlu0 %130
    %132 = vadd.xlane.f32.xlu0 %v115
    %v133 = vpop.xlane.xlu0 %132
    %134 = vadd.xlane.f32.xlu0 %v116
    %v135 = vpop.xlane.xlu0 %134
    %136 = vadd.xlane.f32.xlu0 %v117
    %v137 = vpop.xlane.xlu0 %136
    %138 = vadd.xlane.f32.xlu0 %v118
    %v139 = vpop.xlane.xlu0 %138
    %140 = vadd.xlane.f32.xlu0 %v119
    %v141 = vpop.xlane.xlu0 %140
    %142 = vadd.xlane.f32.xlu0 %v120
    %v143 = vpop.xlane.xlu0 %142
    %144 = vadd.xlane.f32.xlu0 %v121
    %v145 = vpop.xlane.xlu0 %144
    %146 = vadd.xlane.f32.xlu0 %v122
    %v147 = vpop.xlane.xlu0 %146
    %148 = vadd.xlane.f32.xlu0 %v123
    %v149 = vpop.xlane.xlu0 %148
    %150 = vadd.xlane.f32.xlu0 %v124
    %v151 = vpop.xlane.xlu0 %150
    %152 = vadd.xlane.f32.xlu0 %v125
    %v153 = vpop.xlane.xlu0 %152
    %154 = vadd.xlane.f32.xlu0 %v126
    %v155 = vpop.xlane.xlu0 %154
    %156 = vadd.xlane.f32.xlu0 %v127
    %v157 = vpop.xlane.xlu0 %156
    %158 = vadd.xlane.f32.xlu0 %v128
    %v159 = vpop.xlane.xlu0 %158
    %160 = vadd.xlane.f32.xlu0 %v129
    %v161 = vpop.xlane.xlu0 %160
    %v162 = vmax.f32 %v131, 1e-12
    %v163 = vmax.f32 %v133, 1e-12
    %v164 = vmax.f32 %v135, 1e-12
    %v165 = vmax.f32 %v137, 1e-12
    %v166 = vmax.f32 %v139, 1e-12
    %v167 = vmax.f32 %v141, 1e-12
    %v168 = vmax.f32 %v143, 1e-12
    %v169 = vmax.f32 %v145, 1e-12
    %v170 = vmax.f32 %v147, 1e-12
    %v171 = vmax.f32 %v149, 1e-12
    %v172 = vmax.f32 %v151, 1e-12
    %v173 = vmax.f32 %v153, 1e-12
    %v174 = vmax.f32 %v155, 1e-12
    %v175 = vmax.f32 %v157, 1e-12
    %v176 = vmax.f32 %v159, 1e-12
    %v177 = vmax.f32 %v161, 1e-12
    %v178 = vrsqrt.pop %v162
    %v179 = vrsqrt.pop %v163
    %v180 = vrsqrt.pop %v164
    %v181 = vrsqrt.pop %v165
    %v182 = vrsqrt.pop %v166
    %v183 = vrsqrt.pop %v167
    %v184 = vrsqrt.pop %v168
    %v185 = vrsqrt.pop %v169
    %v186 = vrsqrt.pop %v170
    %v187 = vrsqrt.pop %v171
    %v188 = vrsqrt.pop %v172
    %v189 = vrsqrt.pop %v173
    %v190 = vrsqrt.pop %v174
    %v191 = vrsqrt.pop %v175
    %v192 = vrsqrt.pop %v176
    %v193 = vrsqrt.pop %v177
    %v194 = vmul.f32 %v38, %v178
    %v195 = vmul.f32 %v39, %v179
    %v196 = vmul.f32 %v40, %v180
    %v197 = vmul.f32 %v41, %v181
    %v198 = vmul.f32 %v42, %v182
    %v199 = vmul.f32 %v43, %v183
    %v200 = vmul.f32 %v44, %v184
    %v201 = vmul.f32 %v45, %v185
    %v202 = vmul.f32 %v46, %v186
    %v203 = vmul.f32 %v47, %v187
    %v204 = vmul.f32 %v48, %v188
    %v205 = vmul.f32 %v49, %v189
    %v206 = vmul.f32 %v50, %v190
    %v207 = vmul.f32 %v51, %v191
    %v208 = vmul.f32 %v52, %v192
    %v209 = vmul.f32 %v53, %v193
    %v210 = vpack.c.bf16 %v195, %v194
    %v211 = vpack.c.bf16 %v197, %v196
    %v212 = vpack.c.bf16 %v199, %v198
    %v213 = vpack.c.bf16 %v201, %v200
    %v214 = vpack.c.bf16 %v203, %v202
    %v215 = vpack.c.bf16 %v205, %v204
    %v216 = vpack.c.bf16 %v207, %v206
    %v217 = vpack.c.bf16 %v209, %v208
    %v218 = vmul.f32 %v109, %v109
    %219 = vadd.xlane.f32.xlu0 %v218
    %v220 = vpop.xlane.xlu0 %219
    %v221 = vmax.f32 %v220, 1e-12
    %v222 = vrsqrt.pop %v221
    %v223 = vmul.f32 %v109, %v222
    %v224 = vpack.c.bf16 %v223, %v223
    %225 = vmatprep.subr.bf16.mxu0 0
    %226 = vmatpush1.bf16.xpose.msra.mxu0 %v210
    %227 = vmatprep.subr.bf16.mxu0 0
    %228 = vmatpush1.bf16.xpose.msra.mxu0 %v211
    %229 = vmatprep.subr.bf16.mxu0 0
    %230 = vmatpush1.bf16.xpose.msra.mxu0 %v212
    %231 = vmatprep.subr.bf16.mxu0 0
    %232 = vmatpush1.bf16.xpose.msra.mxu0 %v213
    %233 = vmatprep.subr.bf16.mxu0 0
    %234 = vmatpush1.bf16.xpose.msra.mxu0 %v214
    %235 = vmatprep.subr.bf16.mxu0 0
    %236 = vmatpush1.bf16.xpose.msra.mxu0 %v215
    %237 = vmatprep.subr.bf16.mxu0 0
    %238 = vmatpush1.bf16.xpose.msra.mxu0 %v216
    %239 = vmatprep.subr.bf16.mxu0 0
    %240 = vmatpush1.bf16.xpose.msra.mxu0 %v217
    %241 = vmatprep.subr.bf16.mxu0 0
    %242 = vmatpush1.bf16.xpose.msra.mxu0 0
    %243 = vmatprep.subr.bf16.mxu0 0
    %244 = vmatpush1.bf16.xpose.msra.mxu0 0
    %245 = vmatprep.subr.bf16.mxu0 0
    %246 = vmatpush1.bf16.xpose.msra.mxu0 0
    %247 = vmatprep.subr.bf16.mxu0 0
    %248 = vmatpush1.bf16.xpose.msra.mxu0 0
    %249 = vmatprep.subr.bf16.mxu0 0
    %250 = vmatpush1.bf16.xpose.msra.mxu0 0
    %251 = vmatprep.subr.bf16.mxu0 0
    %252 = vmatpush1.bf16.xpose.msra.mxu0 0
    %253 = vmatprep.subr.bf16.mxu0 0
    %254 = vmatpush1.bf16.xpose.msra.mxu0 0
    %255 = vmatprep.subr.bf16.mxu0 0
    %256 = vmatpush1.bf16.xpose.msra.mxu0 0
    %257 = vmatprep.mubr.bf16.mxu0 0
    %258 = vmatmul.mubr.bf16.gmra.mrb[0].mxu0 %v224
    %v259 = vpop.f32.mrb[0].mxu0
    %v260 = vadd.f32 0.0, %v259
    %v261 = vpop.f32.mrb[0].mxu0
    %v262 = vpop.f32.mrb[0].mxu0
    %v263 = vpop.f32.mrb[0].mxu0
    %264 = vdwg.mxu0
    %vm265 = vcmp.lt.s32.totalorder %v58, 16
    %v266 = vsel %vm265, %v260, -1e+30
    %v267 = vsel %vm265, %v55, -1e+30
    %268 = vmax.xlane.f32.xlu0 %v266
    %v269 = vpop.xlane.xlu0 %268
    %v270 = vsub.f32 %v266, %v269
    %v271 = vmul.f32 %v270, 1.442695
    %v272 = vpow.pop %v271
    %273 = vadd.xlane.f32.xlu0 %v272
    %v274 = vpop.xlane.xlu0 %273
    %v275 = vrcp.pop %v274
    %v276 = vmul.f32 %v272, %v275
    %v277 = vsel %vm62, 0.8, 0.013333334
    %v278 = vsel %vm265, %v277, 0.0
    %s279 = ssub.f32 1.0, %s37
    %v280 = vstv %s279
    %v281 = vmul.f32 %v280, %v278
    %v282 = vstv %s37
    %v283 = vmul.f32 %v282, %v276
    %v284 = vadd.f32 %v281, %v283
    %285 = vmax.xlane.f32.xlu0 %v267
    %v286 = vpop.xlane.xlu0 %285
    %v287 = vsub.f32 %v267, %v286
    %v288 = vmul.f32 %v287, 1.442695
    %v289 = vpow.pop %v288
    %290 = vadd.xlane.f32.xlu0 %v289
    %v291 = vpop.xlane.xlu0 %290
    %v292 = vlog2.pop %v291
    %v293 = vmul.f32 %v292, 0.6931472
    %v294 = vsub.f32 %v287, %v293
    %v295 = vmul.f32 %v294, %v284
    %296 = vadd.xlane.f32.xlu0 %v295
    %v297 = vpop.xlane.xlu0 %296
    %v298 = vsub.f32 0.0, %v297
    %v299 = vsub.f32 %v54, %v109
    %v300 = vmul.f32 %v299, %v299
    %301 = vadd.xlane.f32.xlu0 %v300
    %v302 = vpop.xlane.xlu0 %301
    %v303 = vrot.slane %v298, 4
    %v304 = vadd.f32 %v298, %v303
    %v305 = vrot.slane %v304, 2
    %v306 = vadd.f32 %v304, %v305
    %v307 = vrot.slane %v306, 1
    %v308 = vadd.f32 %v306, %v307
    %v309 = vmul.f32 %v308, 0.125
    %v310 = vrot.slane %v302, 4
    %v311 = vadd.f32 %v302, %v310
    %v312 = vrot.slane %v311, 2
    %v313 = vadd.f32 %v311, %v312
    %v314 = vrot.slane %v313, 1
    %v315 = vadd.f32 %v313, %v314
    %v316 = vmul.f32 %v315, 0.0001875
    %v317 = vadd.f32 %v309, %v316
    %p318 = scmp.eq.s32.totalorder 0, 0
    // Predicated region
    $region26: #{tpu_custom_call.1} parent=1 // pred_check
      %p319 = pneg %p318
    $region27: #{tpu_custom_call.1} parent=1 // pred_check_branch
      %321 = sbr.rel (%p319) target = $region29
    $region28: #{tpu_custom_call.1} parent=1 // pred_region
      %vm322 = vcmask 0
      %323 = vst.msk [vmem:[#allocation6] sm:$0x1] %vm322, 0.0
    $region29: #{tpu_custom_call.1} parent=1 // pred_fallthru
      _
    %v324 = vld [vmem:[#allocation6] sm:$0x1]
    %v325 = vadd.f32 %v324, %v317
    %vm326 = vcmask 0
    %327 = vst.msk [vmem:[#allocation6] sm:$0x1] %vm326, %v325
    // Predicated region
    $region30: #{tpu_custom_call.1} parent=1 // pred_check
      _
    $region31: #{tpu_custom_call.1} parent=1 // pred_check_branch
      %329 = sbr.rel (0) target = $region33
    $region32: #{tpu_custom_call.1} parent=1 // pred_region
      %s331 = ssub.s32 16, 16
      %332 = vsyncadd [#allocation5], %s331
      %s334 = sshll.u32 [#allocation6], 4
      %s335 = int_to_ptr.vmem [resolvable:$true] %s334
      %337 = dma.vmem_to_hbm [thread:$0]  %s335, 16, %s5, [#allocation5]
    $region33: #{tpu_custom_call.1} parent=1 // pred_fallthru
      _
    // Predicated region
    $region34: #{tpu_custom_call.1} parent=1 // pred_check
      _
    $region35: #{tpu_custom_call.1} parent=1 // pred_check_branch
      %339 = sbr.rel (0) target = $region37
    $region36: #{tpu_custom_call.1} parent=1 // pred_region
      %340 = dma.done [#allocation5], 16
    $region37: #{tpu_custom_call.1} parent=1 // pred_fallthru
      _
    %341 = vsyncpa [#allocation4], 1
    %342 = vsyncpa [#allocation5], 1

</llo_original>
